<compile_context>
chip_gen: v5e
topology: v5e:2x2
jax: 0.10.0
libtpu: 0.0.40
codegen_flags: <defaults>
</compile_context>

<pallas_src>
import jax
import jax.numpy as jnp
from jax import lax
from jax.experimental import pallas as pl
from jax.experimental.pallas import tpu as pltpu


# ----------------------------- roll-direction probe -----------------------------
# The kernel uses pltpu.roll for the conv2 tap shifts.  Probe once (tiny kernel)
# whether pltpu.roll follows the jnp.roll convention, and pick the shift sign
# accordingly so the main kernel is correct either way.

def _roll_probe_kernel(x_ref, o_ref):
    o_ref[...] = pltpu.roll(x_ref[...], 3, 1)


def _pltpu_roll_matches_jnp_roll():
    x = jnp.arange(8 * 256, dtype=jnp.float32).reshape(8, 256)
    y = pl.pallas_call(
        _roll_probe_kernel,
        out_shape=jax.ShapeDtypeStruct((8, 256), jnp.float32),
    )(x)
    return bool(jnp.array_equal(y, jnp.roll(x, 3, axis=1)))


# --------------------------------- kernel ---------------------------------------

def _make_shake_kernel(H, W, roll_like_jnp):
    HW = H * W

    def kernel(alpha_ref,           # (1, MB)            per-sample alpha, lane-broadcast
               col1_ref,            # (9*Cin, MB)         im2col of raw input (pre-ReLU)
               xres_ref,            # (Cin, MB)           identity residual
               w1_ref,              # (2*Cout, 9*Cin)     both branches, conv1
               sc1_ref, sh1_ref,    # (2*Cout, 1)         folded BN1 scale/shift
               w2_ref,              # (2*Cout, 9*2*Cout)  both branches, conv2 (block-diag)
               sc2_ref, sh2_ref,    # (2*Cout, 1)         folded BN2 scale/shift
               out_ref):            # (Cout, MB)
        Cout, MB = out_ref.shape

        # ---- branch ReLU + conv1 (both branches fused: one matmul) ----
        a0 = jnp.maximum(col1_ref[...], 0.0)                        # ReLU on im2col slab
        h = jnp.dot(w1_ref[...], a0,
                    preferred_element_type=jnp.float32)             # (2*Cout, MB)
        h = jnp.maximum(h * sc1_ref[...] + sh1_ref[...], 0.0)       # BN1 + ReLU

        # ---- in-kernel im2col for conv2: lane roll (XLU) + boundary masks ----
        idx = lax.broadcasted_iota(jnp.int32, (1, MB), 1)
        hh = (idx % HW) // W
        ww = idx % W
        pieces = []
        for kh in range(3):
            for kw in range(3):
                d = (kh - 1) * W + (kw - 1)            # flat spatial offset of this tap
                s = ((-d) % MB) if roll_like_jnp else (d % MB)
                shifted = pltpu.roll(h, s, 1) if s else h
                mask = ((hh + (kh - 1) >= 0) & (hh + (kh - 1) < H) &
                        (ww + (kw - 1) >= 0) & (ww + (kw - 1) < W))
                pieces.append(shifted * mask.astype(jnp.float32))
        col2 = jnp.concatenate(pieces, axis=0)                      # (9*2*Cout, MB)

        # ---- conv2 (both branches, block-diagonal packed weights) + BN2 ----
        y = jnp.dot(w2_ref[...], col2,
                    preferred_element_type=jnp.float32)             # (2*Cout, MB)
        y = y * sc2_ref[...] + sh2_ref[...]

        # ---- shake-shake mix (per-sample alpha) + identity residual ----
        a = alpha_ref[...]                                          # (1, MB)
        mix = a * y[:Cout, :] + (1.0 - a) * y[Cout:, :]
        out_ref[...] = (mix + xres_ref[...]).astype(out_ref.dtype)

    return kernel


# --------------------------------- wrapper ---------------------------------------

def shake_block(x_nchw, params, alpha, *, samples_per_block=1, roll_like_jnp=True):
    """x_nchw: (N, C, H, W) f32, identity-shortcut config (in_ch == out_ch, stride 1)."""
    N, C, H, W = x_nchw.shape
    Cout = C
    HW = H * W
    NB = samples_per_block
    assert N % NB == 0, "samples_per_block must divide batch size"
    M = N * HW
    MB = NB * HW

    x = x_nchw.astype(jnp.float32)

    # identity residual in lane-dense (C, N*H*W) layout
    x_res = jnp.transpose(x, (1, 0, 2, 3)).reshape(C, M)

    # im2col for conv1: rows = tap*Cin + cin, columns = n*HW + h*W + w
    xp = jnp.pad(x, ((0, 0), (0, 0), (1, 1), (1, 1)))
    cols = []
    for kh in range(3):
        for kw in range(3):
            patch = xp[:, :, kh:kh + H, kw:kw + W]                  # (N, C, H, W)
            cols.append(jnp.transpose(patch, (1, 0, 2, 3)).reshape(C, M))
    col1 = jnp.concatenate(cols, axis=0)                            # (9*C, M)

    # per-sample alpha broadcast along the spatial (lane) axis
    alpha_vec = jnp.repeat(alpha.astype(jnp.float32), HW).reshape(1, M)

    kernel = _make_shake_kernel(H, W, roll_like_jnp)
    grid = (N // NB,)

    flops = 2 * (2 * Cout) * (9 * C) * M + 2 * (2 * Cout) * (9 * 2 * Cout) * M
    nbytes = 4 * (col1.size + x_res.size + alpha_vec.size
                  + params["w1"].size + params["w2"].size
                  + params["sc1"].size + params["sh1"].size
                  + params["sc2"].size + params["sh2"].size
                  + Cout * M)

    grid_spec = pltpu.PrefetchScalarGridSpec(
        num_scalar_prefetch=0,
        grid=grid,
        in_specs=[
            pl.BlockSpec((1, MB), lambda g: (0, g)),                    # alpha
            pl.BlockSpec((9 * C, MB), lambda g: (0, g)),                # conv1 im2col
            pl.BlockSpec((C, MB), lambda g: (0, g)),                    # residual
            pl.BlockSpec((2 * Cout, 9 * C), lambda g: (0, 0)),          # w1 packed
            pl.BlockSpec((2 * Cout, 1), lambda g: (0, 0)),              # sc1
            pl.BlockSpec((2 * Cout, 1), lambda g: (0, 0)),              # sh1
            pl.BlockSpec((2 * Cout, 9 * 2 * Cout), lambda g: (0, 0)),   # w2 packed
            pl.BlockSpec((2 * Cout, 1), lambda g: (0, 0)),              # sc2
            pl.BlockSpec((2 * Cout, 1), lambda g: (0, 0)),              # sh2
        ],
        out_specs=pl.BlockSpec((Cout, MB), lambda g: (0, g)),
    )

    out_cm = pl.pallas_call(
        kernel,
        out_shape=jax.ShapeDtypeStruct((Cout, M), jnp.float32),
        grid_spec=grid_spec,
        compiler_params=pltpu.CompilerParams(dimension_semantics=("parallel",)),
        cost_estimate=pl.CostEstimate(flops=flops, transcendentals=0,
                                      bytes_accessed=nbytes),
    )(alpha_vec, col1, x_res,
      params["w1"], params["sc1"], params["sh1"],
      params["w2"], params["sc2"], params["sh2"])

    # (Cout, N*H*W) -> (N, Cout, H, W)
    return jnp.transpose(out_cm.reshape(Cout, N, H, W), (1, 0, 2, 3))


# ----------------------- parameter construction (deterministic) -----------------------

def _folded_bn(kg, kb, km, c, eps=1e-5):
    gamma = 1.0 + 0.1 * jax.random.normal(kg, (c,), jnp.float32)
    beta = 0.1 * jax.random.normal(kb, (c,), jnp.float32)
    mean = 0.1 * jax.random.normal(km, (c,), jnp.float32)
    var = jnp.ones((c,), jnp.float32)                   # PyTorch running_var init
    scale = gamma / jnp.sqrt(var + eps)
    shift = beta - mean * scale
    return scale, shift


def make_params(key, in_ch, out_ch):
    """Returns (packed kernel params, raw per-branch params for the reference)."""
    ks = jax.random.split(key, 16)
    raw = {"w1": [], "sc1": [], "sh1": [], "w2": [], "sc2": [], "sh2": []}
    for br in range(2):
        o = br * 8
        w1 = 0.1 * jax.random.normal(ks[o + 0], (3, 3, in_ch, out_ch), jnp.float32)  # HWIO
        sc1, sh1 = _folded_bn(ks[o + 1], ks[o + 2], ks[o + 3], out_ch)
        w2 = 0.1 * jax.random.normal(ks[o + 4], (3, 3, out_ch, out_ch), jnp.float32)
        sc2, sh2 = _folded_bn(ks[o + 5], ks[o + 6], ks[o + 7], out_ch)
        raw["w1"].append(w1); raw["sc1"].append(sc1); raw["sh1"].append(sh1)
        raw["w2"].append(w2); raw["sc2"].append(sc2); raw["sh2"].append(sh2)

    # conv1 weights, both branches packed along the output-row axis:
    #   w1p[b*Cout + o, tap*Cin + i] = w1[b][kh, kw, i, o],  tap = 3*kh + kw
    w1p = jnp.concatenate(
        [jnp.transpose(w.reshape(9, in_ch, out_ch), (2, 0, 1)).reshape(out_ch, 9 * in_ch)
         for w in raw["w1"]], axis=0)                                   # (2*Cout, 9*Cin)

    # conv2 weights, block-diagonal per tap so one matmul keeps branches separate:
    #   w2p[b*Cout + o, tap*(2*Cout) + b*Cout + i] = w2[b][kh, kw, i, o]
    w2p = jnp.zeros((2 * out_ch, 9, 2 * out_ch), jnp.float32)
    for b, w in enumerate(raw["w2"]):
        blk = jnp.transpose(w.reshape(9, out_ch, out_ch), (2, 0, 1))    # (Cout, 9, Cin)
        w2p = w2p.at[b * out_ch:(b + 1) * out_ch, :,
                     b * out_ch:(b + 1) * out_ch].set(blk)
    w2p = w2p.reshape(2 * out_ch, 9 * 2 * out_ch)

    def col(xs):
        return jnp.concatenate(xs, axis=0).reshape(2 * out_ch, 1)

    kernel_params = {
        "w1": w1p, "sc1": col(raw["sc1"]), "sh1": col(raw["sh1"]),
        "w2": w2p, "sc2": col(raw["sc2"]), "sh2": col(raw["sh2"]),
    }
    return kernel_params, raw


# ----------------------- pure-JAX reference (for verification) -----------------------

def reference_shake_block(x_nchw, raw, alpha):
    x = jnp.transpose(x_nchw, (0, 2, 3, 1))  # NHWC
    dn = ("NHWC", "HWIO", "NHWC")

    def branch(br):
        a = jnp.maximum(x, 0.0)
        y = lax.conv_general_dilated(a, raw["w1"][br], (1, 1), "SAME",
                                     dimension_numbers=dn,
                                     precision=lax.Precision.HIGHEST)
        y = y * raw["sc1"][br] + raw["sh1"][br]
        y = jnp.maximum(y, 0.0)
        y = lax.conv_general_dilated(y, raw["w2"][br], (1, 1), "SAME",
                                     dimension_numbers=dn,
                                     precision=lax.Precision.HIGHEST)
        y = y * raw["sc2"][br] + raw["sh2"][br]
        return y

    y1, y2 = branch(0), branch(1)
    a = alpha.reshape(-1, 1, 1, 1)
    out = a * y1 + (1.0 - a) * y2 + x
    return jnp.transpose(out, (0, 3, 1, 2))


if __name__ == "__main__":
    key = jax.random.PRNGKey(0)
    k_x, k_p, k_a = jax.random.split(key, 3)

    N, C, H, W = 2, 4, 16, 16          # in_ch == out_ch == 4, stride == 1
    x = jax.random.normal(k_x, (N, C, H, W), jnp.float32)
    params, raw = make_params(k_p, C, C)

    roll_like_jnp = _pltpu_roll_matches_jnp_roll()

    # eval-mode ShakeShake: alpha = 0.5 for every sample
    alpha_eval = 0.5 * jnp.ones((N,), jnp.float32)
    out = jax.block_until_ready(
        shake_block(x, params, alpha_eval, roll_like_jnp=roll_like_jnp))
    ref = jax.block_until_ready(reference_shake_block(x, raw, alpha_eval))
    assert out.shape == (N, C, H, W)
    # default (single-pass) MXU precision vs HIGHEST reference -> relaxed tolerance
    assert jnp.allclose(out, ref, rtol=2e-2, atol=2e-2), \
        f"max abs err {float(jnp.max(jnp.abs(out - ref)))}"

    # training-mode ShakeShake: per-sample alpha sampled with jax.random
    alpha_train = jax.random.uniform(k_a, (N,), jnp.float32)
    out_t = jax.block_until_ready(
        shake_block(x, params, alpha_train, roll_like_jnp=roll_like_jnp))
    ref_t = jax.block_until_ready(reference_shake_block(x, raw, alpha_train))
    assert jnp.allclose(out_t, ref_t, rtol=2e-2, atol=2e-2), \
        f"max abs err {float(jnp.max(jnp.abs(out_t - ref_t)))}"

    print("KERNEL_OK")
</pallas_src>

<mosaic_0001>
module attributes {stable_mosaic.version = 11 : i64} {
  func.func @_roll_probe_kernel(%arg0: memref<8x256xf32, #tpu.memory_space<vmem>>, %arg1: memref<8x256xf32, #tpu.memory_space<vmem>>) attributes {dimension_semantics = [], scalar_prefetch = 0 : i64, scratch_operands = 0 : i64, tpu.core_type = #tpu.core_type<tc>} {
    %c0 = arith.constant 0 : index
    %c0_0 = arith.constant 0 : index
    %0 = vector.load %arg0[%c0, %c0_0] : memref<8x256xf32, #tpu.memory_space<vmem>>, vector<8x256xf32>
    %c3_i32 = arith.constant 3 : i32
    %1 = tpu.dynamic_rotate %0 by %c3_i32 dim 1 : vector<8x256xf32>, i32 -> vector<8x256xf32>
    %c0_1 = arith.constant 0 : index
    %c0_2 = arith.constant 0 : index
    %2 = vector.load %arg1[%c0_1, %c0_2] : memref<8x256xf32, #tpu.memory_space<vmem>>, vector<8x256xf32>
    tpu.vector_store %arg1[%c0_1, %c0_2], %1 {strides = array<i32>} : memref<8x256xf32, #tpu.memory_space<vmem>>, vector<8x256xf32>,
    return
  }
}

</mosaic_0001>

<llo_original>
// kernel: tpu_custom_call.1
$region0: #{tpu_custom_call.1}
  #allocation0 [shape = 'u32[]', space=smem, size = 0x4, offset = 0x4, fixed_abs, tag = 'smem constant byte address 0x4 - core index']
  #allocation1 [shape = 'u32[72,128]{1,0:T(1,128)}', space=vmem, size = 0x9000, scoped, tag = 'internal scratch']
  %s0 = inlined_call_operand.hbm [shape: f32[8,256], index: 0, kind: input, shape index: {}]
  %s1 = inlined_call_operand.hbm [shape: f32[8,256], index: 1, kind: output, shape index: {}]
  %s2 = sld [smem:[#allocation0]]
  $region18: #{tpu_custom_call.1} parent=0
    _
  %s4 = ssub.s32 1, %s2
  %s5 = scalar_select 0, %s4, %s2
  $region1: #{tpu_custom_call.1} parent=0
    #allocation2 [shape = 'u8[8192]{0}', space=vmem, size = 0x2000, scoped, tag = 'input window, operand 0, single buffered']
    #allocation3 [shape = 's32[1]{0}', space=sflag, size = 0x4, scoped, tag = 'scoped memory for tpu_custom_call.1']
    #allocation4 [shape = 's32[1]{0}', space=sflag, size = 0x4, scoped, tag = 'scoped memory for tpu_custom_call.1']
    #allocation5 [shape = 'u8[8192]{0}', space=vmem, size = 0x2000, scoped, tag = 'output window, operand 0, single buffered']
    %6 = vsyncpa [#allocation3], 0
    %7 = vsyncpa [#allocation4], 0
    // Predicated region
    $region2: #{tpu_custom_call.1} parent=1 // pred_check
      _
    $region3: #{tpu_custom_call.1} parent=1 // pred_check_branch
      %9 = sbr.rel (0) target = $region5
    $region4: #{tpu_custom_call.1} parent=1 // pred_region
      %11 = vsyncadd [#allocation3], 0
      %s13 = sshll.u32 %s0, 4
      %s14 = int_to_ptr.hbm [resolvable:$true] %s13
      %s15 = sshll.u32 [#allocation2], 4
      %s16 = int_to_ptr.vmem [resolvable:$true] %s15
      %18 = dma.hbm_to_vmem [thread:$0]  %s14, 256, %s16, [#allocation3]
    $region5: #{tpu_custom_call.1} parent=1 // pred_fallthru
      _
    // Predicated region
    $region6: #{tpu_custom_call.1} parent=1 // pred_check
      _
    $region7: #{tpu_custom_call.1} parent=1 // pred_check_branch
      %20 = sbr.rel (0) target = $region9
    $region8: #{tpu_custom_call.1} parent=1 // pred_region
      %22 = dma.done [#allocation3], 256
    $region9: #{tpu_custom_call.1} parent=1 // pred_fallthru
      _
    %v23 = vld [vmem:[#allocation2] sm:$0xff]
    %v24 = vld [vmem:[#allocation2 + $0x8] sm:$0xff]
    %25 = vrot.lane.b32.xlu0 %v23, 3
    %v26 = vpop.permute.xlu0 %25
    %27 = vrot.lane.b32.xlu0 %v24, 3
    %v28 = vpop.permute.xlu0 %27
    %v29 = vlaneseq
    %v30 = vand.u32 %v29, 127
    %vm31 = vcmp.lt.s32.totalorder %v30, 3
    %v32 = vsel %vm31, %v26, %v28
    %v33 = vsel %vm31, %v28, %v26
    %34 = vst [vmem:[#allocation5] sm:$0xff] %v33
    %35 = vst [vmem:[#allocation5 + $0x8] sm:$0xff] %v32
    // Predicated region
    $region10: #{tpu_custom_call.1} parent=1 // pred_check
      _
    $region11: #{tpu_custom_call.1} parent=1 // pred_check_branch
      %37 = sbr.rel (0) target = $region13
    $region12: #{tpu_custom_call.1} parent=1 // pred_region
      %39 = vsyncadd [#allocation4], 0
      %s41 = sshll.u32 [#allocation5], 4
      %s42 = int_to_ptr.vmem [resolvable:$true] %s41
      %s43 = sshll.u32 %s1, 4
      %s44 = int_to_ptr.hbm [resolvable:$true] %s43
      %46 = dma.vmem_to_hbm [thread:$0]  %s42, 256, %s44, [#allocation4]
    $region13: #{tpu_custom_call.1} parent=1 // pred_fallthru
      _
    // Predicated region
    $region14: #{tpu_custom_call.1} parent=1 // pred_check
      _
    $region15: #{tpu_custom_call.1} parent=1 // pred_check_branch
      %48 = sbr.rel (0) target = $region17
    $region16: #{tpu_custom_call.1} parent=1 // pred_region
      %50 = dma.done [#allocation4], 256
    $region17: #{tpu_custom_call.1} parent=1 // pred_fallthru
      _
    %51 = vsyncpa [#allocation3], 1
    %52 = vsyncpa [#allocation4], 1

</llo_original>
